<compile_context>
chip_gen: v7x
topology: tpu7x:2x2x1
jax: 0.10.0
libtpu: 0.0.40
codegen_flags: <defaults>
</compile_context>

<pallas_src>
import jax
import jax.numpy as jnp
from jax.experimental import pallas as pl
from jax.experimental.pallas import tpu as pltpu

MAX_S_TILE = 512  # 512 sublane-blocks * 128 lanes = 65536 pixels per grid step


def _round_up(x, m):
    return ((x + m - 1) // m) * m


def _pick_s_tile(S):
    """Largest tile <= MAX_S_TILE; prefer exact divisors of S (no partial blocks)."""
    if S <= MAX_S_TILE:
        return S
    for d in range(MAX_S_TILE, 127, -8):      # multiples of 8 only
        if S % d == 0:
            return d
    # Fall back to a partial last tile; OOB output rows are dropped by Pallas and
    # OOB input reads are masked out of the loss inside the kernel.
    return MAX_S_TILE


def _make_kernel(n_out, n_in, n_valid, s_tile, t_inner, num_tiles_total):
    """Fused 1x1-conv head + squared-error accumulation for static sizes."""
    needs_mask = (num_tiles_total * s_tile * 128) != n_valid
    last_tile = num_tiles_total - 1

    def kernel(w_ref, b_ref, x_ref, tgt_ref, rgb_ref, partial_ref, acc_ref):
        ti = pl.program_id(2)
        t_global = pl.program_id(1) * t_inner + ti

        @pl.when(ti == 0)
        def _():
            acc_ref[...] = jnp.zeros_like(acc_ref)

        x = x_ref[0].astype(jnp.float32)        # (C_in, S_TILE, 128)
        tgt = tgt_ref[0].astype(jnp.float32)    # (3,    S_TILE, 128)

        # Tiny linear head as full-vreg VPU FMAs (scalar weights from SMEM).
        # Rows are stored directly; squared errors collapse into one slab.
        sq = None
        for r in range(n_out):
            pred = x[0] * w_ref[r]
            for c in range(1, n_in):
                pred = pred + x[c] * w_ref[c * n_out + r]
            pred = pred + b_ref[r]
            rgb_ref[0, r] = pred.astype(rgb_ref.dtype)   # dense (S_TILE,128) store
            d = pred - tgt[r]
            sq = d * d if sq is None else sq + d * d

        if needs_mask:
            is_last = t_global == last_tile

            @pl.when(is_last)
            def _():
                s_idx = jax.lax.broadcasted_iota(jnp.int32, (s_tile, 128), 0)
                l_idx = jax.lax.broadcasted_iota(jnp.int32, (s_tile, 128), 1)
                pix = (t_global * s_tile + s_idx) * 128 + l_idx
                acc_ref[...] += jnp.where(pix < n_valid, sq, 0.0)

            @pl.when(jnp.logical_not(is_last))
            def _():
                acc_ref[...] += sq
        else:
            acc_ref[...] += sq

        # Single cross-lane reduce + scalar write only on the last inner step.
        @pl.when(ti == pl.num_programs(2) - 1)
        def _():
            partial_ref[...] = jnp.sum(acc_ref[...]).reshape(1, 1, 1, 1)

    return kernel


@jax.jit
def network_wrapper_forward(feat_nchw, rgb_gt_nchw, w, b):
    """Mirrors NetworkWrapper.forward.

    feat_nchw   : (B, C_in, H, W)  -- the "batch" fed to the synthetic net
    rgb_gt_nchw : (B, 3,    H, W)  -- batch['rgb'] target
    w           : (C_in, 3)        -- synthetic 1x1-conv weights
    b           : (1, 3)           -- synthetic bias
    """
    B, C, H, W = feat_nchw.shape
    n_out = rgb_gt_nchw.shape[1]   # 3
    P = H * W
    P128 = _round_up(P, 128)

    x = feat_nchw.reshape(B, C, P)
    tgt = rgb_gt_nchw.reshape(B, n_out, P)
    if P128 != P:
        # Rare fallback: one copy to reach the 128-lane boundary required by the
        # dense (S,128) layout; padded pixels are masked out of the loss in-kernel
        # and sliced off the output below.
        x = jnp.pad(x, ((0, 0), (0, 0), (0, P128 - P)))
        tgt = jnp.pad(tgt, ((0, 0), (0, 0), (0, P128 - P)))

    S = P128 // 128
    # Free reshapes (native NCHW memory order): pixels -> (sublane-blocks, 128 lanes).
    x = x.reshape(B, C, S, 128)
    tgt = tgt.reshape(B, n_out, S, 128)

    s_tile = _pick_s_tile(S)
    num_tiles = -(-S // s_tile)
    # v7x: when B is small, split the pixel-tile axis into a second parallel axis
    # so both TensorCores stay busy; only when it splits evenly.
    G = 2 if (num_tiles >= 2 and num_tiles % 2 == 0) else 1
    t_inner = num_tiles // G

    w_flat = w.reshape(-1).astype(jnp.float32)   # w[c, r] -> w_flat[c*n_out + r]
    b_flat = b.reshape(-1).astype(jnp.float32)   # (3,)

    kernel = _make_kernel(n_out, C, P, s_tile, t_inner, num_tiles)

    itemsize = jnp.dtype(feat_nchw.dtype).itemsize
    cost = pl.CostEstimate(
        flops=int(B * P * (6 * C + 3 * n_out)),
        transcendentals=0,
        bytes_accessed=int(B * P128 * (C + 2 * n_out) * itemsize),
    )

    rgb4, partials = pl.pallas_call(
        kernel,
        out_shape=(
            jax.ShapeDtypeStruct((B, n_out, S, 128), feat_nchw.dtype),
            jax.ShapeDtypeStruct((B, G, 1, 1), jnp.float32),
        ),
        grid_spec=pltpu.PrefetchScalarGridSpec(
            num_scalar_prefetch=0,
            grid=(B, G, t_inner),
            in_specs=[
                pl.BlockSpec(memory_space=pltpu.MemorySpace.SMEM),   # w scalars
                pl.BlockSpec(memory_space=pltpu.MemorySpace.SMEM),   # b scalars
                pl.BlockSpec((1, C, s_tile, 128),
                             lambda bi, gi, ti: (bi, 0, gi * t_inner + ti, 0)),
                pl.BlockSpec((1, n_out, s_tile, 128),
                             lambda bi, gi, ti: (bi, 0, gi * t_inner + ti, 0)),
            ],
            out_specs=(
                pl.BlockSpec((1, n_out, s_tile, 128),
                             lambda bi, gi, ti: (bi, 0, gi * t_inner + ti, 0)),
                pl.BlockSpec((1, 1, 1, 1), lambda bi, gi, ti: (bi, gi, 0, 0)),
            ),
            scratch_shapes=[pltpu.VMEM((s_tile, 128), jnp.float32)],  # sq-err slab
        ),
        compiler_params=pltpu.CompilerParams(
            dimension_semantics=("parallel", "parallel", "arbitrary"),
            vmem_limit_bytes=32 * 1024 * 1024,
        ),
        cost_estimate=cost,
    )(w_flat, b_flat, x, tgt)

    # Scalar glue (nn.MSELoss(reduction='mean') + the psnr lambda on detached mse).
    color_mse = jnp.sum(partials) / jnp.float32(B * n_out * P)
    loss = color_mse
    psnr = -10.0 * jnp.log(jax.lax.stop_gradient(color_mse)) / jnp.log(
        jnp.float32(10.0))

    rgb = rgb4.reshape(B, n_out, P128)
    if P128 != P:
        rgb = rgb[:, :, :P]
    rgb = rgb.reshape(B, n_out, H, W)

    output = {"rgb": rgb}
    scalar_stats = {"color_mse": color_mse, "psnr": psnr, "loss": loss}
    image_stats = {}
    return output, loss, scalar_stats, image_stats


if __name__ == "__main__":
    key = jax.random.PRNGKey(0)
    k_feat, k_rgb, k_w, k_b = jax.random.split(key, 4)

    B, C, H, W = 2, 4, 16, 16
    feat = jax.random.normal(k_feat, (B, C, H, W), dtype=jnp.float32)
    rgb_gt = jax.random.uniform(k_rgb, (B, 3, H, W), dtype=jnp.float32)

    # Deterministic synthetic-net parameters (1x1 conv: C -> 3).
    w = 0.1 * jax.random.normal(k_w, (C, 3), dtype=jnp.float32)
    b = 0.01 * jax.random.normal(k_b, (1, 3), dtype=jnp.float32)

    output, loss, scalar_stats, image_stats = network_wrapper_forward(
        feat, rgb_gt, w, b)
    jax.block_until_ready((output, loss, scalar_stats))

    # Cross-check against a pure-JAX reference of the same math.
    pred_ref = jnp.einsum("bchw,cr->brhw", feat, w) + b.reshape(1, 3, 1, 1)
    mse_ref = jnp.mean((pred_ref - rgb_gt) ** 2)
    assert jnp.allclose(output["rgb"], pred_ref, atol=1e-5, rtol=1e-5)
    assert jnp.allclose(loss, mse_ref, atol=1e-6, rtol=1e-5)
    assert jnp.allclose(scalar_stats["color_mse"], mse_ref, atol=1e-6, rtol=1e-5)
    assert bool(jnp.isfinite(scalar_stats["psnr"]))

    print("KERNEL_OK")
</pallas_src>

<mosaic_0001>
module attributes {stable_mosaic.version = 11 : i64} {
  func.func @kernel(%arg0: i32, %arg1: i32, %arg2: i32, %arg3: memref<12xf32, #tpu.memory_space<smem>>, %arg4: memref<3xf32, #tpu.memory_space<smem>>, %arg5: memref<1x4x2x128xf32, #tpu.memory_space<vmem>>, %arg6: memref<1x3x2x128xf32, #tpu.memory_space<vmem>>, %arg7: memref<1x3x2x128xf32, #tpu.memory_space<vmem>>, %arg8: memref<1x1x1x1xf32, #tpu.memory_space<vmem>>, %arg9: memref<2x128xf32, #tpu.memory_space<vmem>>) attributes {dimension_semantics = [#tpu.dimension_semantics<parallel>, #tpu.dimension_semantics<parallel>, #tpu.dimension_semantics<arbitrary>], iteration_bounds = array<i64: 2, 1, 1>, scalar_prefetch = 0 : i64, scratch_operands = 1 : i64, tpu.core_type = #tpu.core_type<tc>, window_params = [{transform_indices = @transform_0, window_bounds = array<i64: 12>}, {transform_indices = @transform_1, window_bounds = array<i64: 3>}, {transform_indices = @transform_2, window_bounds = array<i64: 1, 4, 2, 128>}, {transform_indices = @transform_3, window_bounds = array<i64: 1, 3, 2, 128>}, {transform_indices = @transform_4, window_bounds = array<i64: 1, 3, 2, 128>}, {transform_indices = @transform_5, window_bounds = array<i64: 1, 1, 1, 1>}]} {
    %c0_i32 = arith.constant 0 : i32
    %0 = arith.cmpi eq, %arg2, %c0_i32 : i32
    %1 = arith.extui %0 : i1 to i32
    %c0_i32_0 = arith.constant 0 : i32
    %2 = arith.cmpi ne, %1, %c0_i32_0 : i32
    scf.if %2 {
      %cst = arith.constant 0.000000e+00 : f32
      %114 = vector.broadcast %cst : f32 to vector<2x128xf32>
      %c0_30 = arith.constant 0 : index
      %c0_31 = arith.constant 0 : index
      %115 = vector.load %arg9[%c0_30, %c0_31] : memref<2x128xf32, #tpu.memory_space<vmem>>, vector<2x128xf32>
      tpu.vector_store %arg9[%c0_30, %c0_31], %114 {strides = array<i32>} : memref<2x128xf32, #tpu.memory_space<vmem>>, vector<2x128xf32>,
    } else {
    }
    %c0 = arith.constant 0 : index
    %c0_1 = arith.constant 0 : index
    %c0_2 = arith.constant 0 : index
    %c0_3 = arith.constant 0 : index
    %3 = vector.load %arg5[%c0, %c0_1, %c0_2, %c0_3] : memref<1x4x2x128xf32, #tpu.memory_space<vmem>>, vector<1x4x2x128xf32>
    %4 = vector.shape_cast %3 : vector<1x4x2x128xf32> to vector<4x2x128xf32>
    %c0_4 = arith.constant 0 : index
    %c0_5 = arith.constant 0 : index
    %c0_6 = arith.constant 0 : index
    %c0_7 = arith.constant 0 : index
    %5 = vector.load %arg6[%c0_4, %c0_5, %c0_6, %c0_7] : memref<1x3x2x128xf32, #tpu.memory_space<vmem>>, vector<1x3x2x128xf32>
    %6 = vector.shape_cast %5 : vector<1x3x2x128xf32> to vector<3x2x128xf32>
    %7 = vector.extract_strided_slice %4 {offsets = [0, 0, 0], sizes = [1, 2, 128], strides = [1, 1, 1]} : vector<4x2x128xf32> to vector<1x2x128xf32>
    %8 = vector.shape_cast %7 : vector<1x2x128xf32> to vector<2x128xf32>
    %c0_8 = arith.constant 0 : index
    %9 = memref.load %arg3[%c0_8] : memref<12xf32, #tpu.memory_space<smem>>
    %10 = vector.broadcast %9 : f32 to vector<2x128xf32>
    %11 = arith.mulf %8, %10 : vector<2x128xf32>
    %12 = vector.extract_strided_slice %4 {offsets = [1, 0, 0], sizes = [1, 2, 128], strides = [1, 1, 1]} : vector<4x2x128xf32> to vector<1x2x128xf32>
    %13 = vector.shape_cast %12 : vector<1x2x128xf32> to vector<2x128xf32>
    %c3 = arith.constant 3 : index
    %14 = memref.load %arg3[%c3] : memref<12xf32, #tpu.memory_space<smem>>
    %15 = vector.broadcast %14 : f32 to vector<2x128xf32>
    %16 = arith.mulf %13, %15 : vector<2x128xf32>
    %17 = arith.addf %11, %16 : vector<2x128xf32>
    %18 = vector.extract_strided_slice %4 {offsets = [2, 0, 0], sizes = [1, 2, 128], strides = [1, 1, 1]} : vector<4x2x128xf32> to vector<1x2x128xf32>
    %19 = vector.shape_cast %18 : vector<1x2x128xf32> to vector<2x128xf32>
    %c6 = arith.constant 6 : index
    %20 = memref.load %arg3[%c6] : memref<12xf32, #tpu.memory_space<smem>>
    %21 = vector.broadcast %20 : f32 to vector<2x128xf32>
    %22 = arith.mulf %19, %21 : vector<2x128xf32>
    %23 = arith.addf %17, %22 : vector<2x128xf32>
    %24 = vector.extract_strided_slice %4 {offsets = [3, 0, 0], sizes = [1, 2, 128], strides = [1, 1, 1]} : vector<4x2x128xf32> to vector<1x2x128xf32>
    %25 = vector.shape_cast %24 : vector<1x2x128xf32> to vector<2x128xf32>
    %c9 = arith.constant 9 : index
    %26 = memref.load %arg3[%c9] : memref<12xf32, #tpu.memory_space<smem>>
    %27 = vector.broadcast %26 : f32 to vector<2x128xf32>
    %28 = arith.mulf %25, %27 : vector<2x128xf32>
    %29 = arith.addf %23, %28 : vector<2x128xf32>
    %c0_9 = arith.constant 0 : index
    %30 = memref.load %arg4[%c0_9] : memref<3xf32, #tpu.memory_space<smem>>
    %31 = vector.broadcast %30 : f32 to vector<2x128xf32>
    %32 = arith.addf %29, %31 : vector<2x128xf32>
    %c0_10 = arith.constant 0 : index
    %c0_11 = arith.constant 0 : index
    %c0_12 = arith.constant 0 : index
    %c0_13 = arith.constant 0 : index
    %33 = vector.load %arg7[%c0_10, %c0_11, %c0_12, %c0_13] : memref<1x3x2x128xf32, #tpu.memory_space<vmem>>, vector<1x1x2x128xf32>
    %34 = vector.shape_cast %33 : vector<1x1x2x128xf32> to vector<2x128xf32>
    %35 = vector.shape_cast %32 : vector<2x128xf32> to vector<1x1x2x128xf32>
    tpu.vector_store %arg7[%c0_10, %c0_11, %c0_12, %c0_13], %35 {strides = array<i32>} : memref<1x3x2x128xf32, #tpu.memory_space<vmem>>, vector<1x1x2x128xf32>,
    %36 = vector.extract_strided_slice %6 {offsets = [0, 0, 0], sizes = [1, 2, 128], strides = [1, 1, 1]} : vector<3x2x128xf32> to vector<1x2x128xf32>
    %37 = vector.shape_cast %36 : vector<1x2x128xf32> to vector<2x128xf32>
    %38 = arith.subf %32, %37 : vector<2x128xf32>
    %39 = arith.mulf %38, %38 : vector<2x128xf32>
    %40 = vector.extract_strided_slice %4 {offsets = [0, 0, 0], sizes = [1, 2, 128], strides = [1, 1, 1]} : vector<4x2x128xf32> to vector<1x2x128xf32>
    %41 = vector.shape_cast %40 : vector<1x2x128xf32> to vector<2x128xf32>
    %c1 = arith.constant 1 : index
    %42 = memref.load %arg3[%c1] : memref<12xf32, #tpu.memory_space<smem>>
    %43 = vector.broadcast %42 : f32 to vector<2x128xf32>
    %44 = arith.mulf %41, %43 : vector<2x128xf32>
    %45 = vector.extract_strided_slice %4 {offsets = [1, 0, 0], sizes = [1, 2, 128], strides = [1, 1, 1]} : vector<4x2x128xf32> to vector<1x2x128xf32>
    %46 = vector.shape_cast %45 : vector<1x2x128xf32> to vector<2x128xf32>
    %c4 = arith.constant 4 : index
    %47 = memref.load %arg3[%c4] : memref<12xf32, #tpu.memory_space<smem>>
    %48 = vector.broadcast %47 : f32 to vector<2x128xf32>
    %49 = arith.mulf %46, %48 : vector<2x128xf32>
    %50 = arith.addf %44, %49 : vector<2x128xf32>
    %51 = vector.extract_strided_slice %4 {offsets = [2, 0, 0], sizes = [1, 2, 128], strides = [1, 1, 1]} : vector<4x2x128xf32> to vector<1x2x128xf32>
    %52 = vector.shape_cast %51 : vector<1x2x128xf32> to vector<2x128xf32>
    %c7 = arith.constant 7 : index
    %53 = memref.load %arg3[%c7] : memref<12xf32, #tpu.memory_space<smem>>
    %54 = vector.broadcast %53 : f32 to vector<2x128xf32>
    %55 = arith.mulf %52, %54 : vector<2x128xf32>
    %56 = arith.addf %50, %55 : vector<2x128xf32>
    %57 = vector.extract_strided_slice %4 {offsets = [3, 0, 0], sizes = [1, 2, 128], strides = [1, 1, 1]} : vector<4x2x128xf32> to vector<1x2x128xf32>
    %58 = vector.shape_cast %57 : vector<1x2x128xf32> to vector<2x128xf32>
    %c10 = arith.constant 10 : index
    %59 = memref.load %arg3[%c10] : memref<12xf32, #tpu.memory_space<smem>>
    %60 = vector.broadcast %59 : f32 to vector<2x128xf32>
    %61 = arith.mulf %58, %60 : vector<2x128xf32>
    %62 = arith.addf %56, %61 : vector<2x128xf32>
    %c1_14 = arith.constant 1 : index
    %63 = memref.load %arg4[%c1_14] : memref<3xf32, #tpu.memory_space<smem>>
    %64 = vector.broadcast %63 : f32 to vector<2x128xf32>
    %65 = arith.addf %62, %64 : vector<2x128xf32>
    %c0_15 = arith.constant 0 : index
    %c1_16 = arith.constant 1 : index
    %c0_17 = arith.constant 0 : index
    %c0_18 = arith.constant 0 : index
    %66 = vector.load %arg7[%c0_15, %c1_16, %c0_17, %c0_18] : memref<1x3x2x128xf32, #tpu.memory_space<vmem>>, vector<1x1x2x128xf32>
    %67 = vector.shape_cast %66 : vector<1x1x2x128xf32> to vector<2x128xf32>
    %68 = vector.shape_cast %65 : vector<2x128xf32> to vector<1x1x2x128xf32>
    tpu.vector_store %arg7[%c0_15, %c1_16, %c0_17, %c0_18], %68 {strides = array<i32>} : memref<1x3x2x128xf32, #tpu.memory_space<vmem>>, vector<1x1x2x128xf32>,
    %69 = vector.extract_strided_slice %6 {offsets = [1, 0, 0], sizes = [1, 2, 128], strides = [1, 1, 1]} : vector<3x2x128xf32> to vector<1x2x128xf32>
    %70 = vector.shape_cast %69 : vector<1x2x128xf32> to vector<2x128xf32>
    %71 = arith.subf %65, %70 : vector<2x128xf32>
    %72 = arith.mulf %71, %71 : vector<2x128xf32>
    %73 = arith.addf %39, %72 : vector<2x128xf32>
    %74 = vector.extract_strided_slice %4 {offsets = [0, 0, 0], sizes = [1, 2, 128], strides = [1, 1, 1]} : vector<4x2x128xf32> to vector<1x2x128xf32>
    %75 = vector.shape_cast %74 : vector<1x2x128xf32> to vector<2x128xf32>
    %c2 = arith.constant 2 : index
    %76 = memref.load %arg3[%c2] : memref<12xf32, #tpu.memory_space<smem>>
    %77 = vector.broadcast %76 : f32 to vector<2x128xf32>
    %78 = arith.mulf %75, %77 : vector<2x128xf32>
    %79 = vector.extract_strided_slice %4 {offsets = [1, 0, 0], sizes = [1, 2, 128], strides = [1, 1, 1]} : vector<4x2x128xf32> to vector<1x2x128xf32>
    %80 = vector.shape_cast %79 : vector<1x2x128xf32> to vector<2x128xf32>
    %c5 = arith.constant 5 : index
    %81 = memref.load %arg3[%c5] : memref<12xf32, #tpu.memory_space<smem>>
    %82 = vector.broadcast %81 : f32 to vector<2x128xf32>
    %83 = arith.mulf %80, %82 : vector<2x128xf32>
    %84 = arith.addf %78, %83 : vector<2x128xf32>
    %85 = vector.extract_strided_slice %4 {offsets = [2, 0, 0], sizes = [1, 2, 128], strides = [1, 1, 1]} : vector<4x2x128xf32> to vector<1x2x128xf32>
    %86 = vector.shape_cast %85 : vector<1x2x128xf32> to vector<2x128xf32>
    %c8 = arith.constant 8 : index
    %87 = memref.load %arg3[%c8] : memref<12xf32, #tpu.memory_space<smem>>
    %88 = vector.broadcast %87 : f32 to vector<2x128xf32>
    %89 = arith.mulf %86, %88 : vector<2x128xf32>
    %90 = arith.addf %84, %89 : vector<2x128xf32>
    %91 = vector.extract_strided_slice %4 {offsets = [3, 0, 0], sizes = [1, 2, 128], strides = [1, 1, 1]} : vector<4x2x128xf32> to vector<1x2x128xf32>
    %92 = vector.shape_cast %91 : vector<1x2x128xf32> to vector<2x128xf32>
    %c11 = arith.constant 11 : index
    %93 = memref.load %arg3[%c11] : memref<12xf32, #tpu.memory_space<smem>>
    %94 = vector.broadcast %93 : f32 to vector<2x128xf32>
    %95 = arith.mulf %92, %94 : vector<2x128xf32>
    %96 = arith.addf %90, %95 : vector<2x128xf32>
    %c2_19 = arith.constant 2 : index
    %97 = memref.load %arg4[%c2_19] : memref<3xf32, #tpu.memory_space<smem>>
    %98 = vector.broadcast %97 : f32 to vector<2x128xf32>
    %99 = arith.addf %96, %98 : vector<2x128xf32>
    %c0_20 = arith.constant 0 : index
    %c2_21 = arith.constant 2 : index
    %c0_22 = arith.constant 0 : index
    %c0_23 = arith.constant 0 : index
    %100 = vector.load %arg7[%c0_20, %c2_21, %c0_22, %c0_23] : memref<1x3x2x128xf32, #tpu.memory_space<vmem>>, vector<1x1x2x128xf32>
    %101 = vector.shape_cast %100 : vector<1x1x2x128xf32> to vector<2x128xf32>
    %102 = vector.shape_cast %99 : vector<2x128xf32> to vector<1x1x2x128xf32>
    tpu.vector_store %arg7[%c0_20, %c2_21, %c0_22, %c0_23], %102 {strides = array<i32>} : memref<1x3x2x128xf32, #tpu.memory_space<vmem>>, vector<1x1x2x128xf32>,
    %103 = vector.extract_strided_slice %6 {offsets = [2, 0, 0], sizes = [1, 2, 128], strides = [1, 1, 1]} : vector<3x2x128xf32> to vector<1x2x128xf32>
    %104 = vector.shape_cast %103 : vector<1x2x128xf32> to vector<2x128xf32>
    %105 = arith.subf %99, %104 : vector<2x128xf32>
    %106 = arith.mulf %105, %105 : vector<2x128xf32>
    %107 = arith.addf %73, %106 : vector<2x128xf32>
    %c0_24 = arith.constant 0 : index
    %c0_25 = arith.constant 0 : index
    %108 = vector.load %arg9[%c0_24, %c0_25] : memref<2x128xf32, #tpu.memory_space<vmem>>, vector<2x128xf32>
    %109 = arith.addf %108, %107 : vector<2x128xf32>
    %c0_26 = arith.constant 0 : index
    %c0_27 = arith.constant 0 : index
    %110 = vector.load %arg9[%c0_26, %c0_27] : memref<2x128xf32, #tpu.memory_space<vmem>>, vector<2x128xf32>
    tpu.vector_store %arg9[%c0_26, %c0_27], %109 {strides = array<i32>} : memref<2x128xf32, #tpu.memory_space<vmem>>, vector<2x128xf32>,
    %c0_i32_28 = arith.constant 0 : i32
    %111 = arith.cmpi eq, %arg2, %c0_i32_28 : i32
    %112 = arith.extui %111 : i1 to i32
    %c0_i32_29 = arith.constant 0 : i32
    %113 = arith.cmpi ne, %112, %c0_i32_29 : i32
    scf.if %113 {
      %c0_30 = arith.constant 0 : index
      %c0_31 = arith.constant 0 : index
      %114 = vector.load %arg9[%c0_30, %c0_31] : memref<2x128xf32, #tpu.memory_space<vmem>>, vector<2x128xf32>
      %115 = vector.shape_cast %114 : vector<2x128xf32> to vector<1x2x128xf32>
      %cst = arith.constant dense<0.000000e+00> : vector<1xf32>
      %116 = vector.multi_reduction <add>, %115, %cst [1, 2] : vector<1x2x128xf32> to vector<1xf32>
      %117 = vector.shape_cast %116 : vector<1xf32> to vector<1x1x1xf32>
      %118 = vector.extract %117[0, 0, 0] : f32 from vector<1x1x1xf32>
      %119 = vector.broadcast %118 : f32 to vector<1x1x1x1xf32>
      %c0_32 = arith.constant 0 : index
      %c0_33 = arith.constant 0 : index
      %c0_34 = arith.constant 0 : index
      %c0_35 = arith.constant 0 : index
      %120 = vector.load %arg8[%c0_32, %c0_33, %c0_34, %c0_35] : memref<1x1x1x1xf32, #tpu.memory_space<vmem>>, vector<1x1x1x1xf32>
      tpu.vector_store %arg8[%c0_32, %c0_33, %c0_34, %c0_35], %119 {strides = array<i32>} : memref<1x1x1x1xf32, #tpu.memory_space<vmem>>, vector<1x1x1x1xf32>,
    } else {
    }
    return
  }
  func.func @transform_0(%arg0: i32, %arg1: i32, %arg2: i32) -> i32 {
    %c0_i32 = arith.constant 0 : i32
    %c0_i32_0 = arith.constant 0 : i32
    return %c0_i32 : i32
  }
  func.func @transform_1(%arg0: i32, %arg1: i32, %arg2: i32) -> i32 {
    %c0_i32 = arith.constant 0 : i32
    %c0_i32_0 = arith.constant 0 : i32
    return %c0_i32 : i32
  }
  func.func @transform_2(%arg0: i32, %arg1: i32, %arg2: i32) -> (i32, i32, i32, i32) {
    %c1_i32 = arith.constant 1 : i32
    %0 = arith.muli %arg1, %c1_i32 : i32
    %1 = arith.addi %0, %arg2 : i32
    %c0_i32 = arith.constant 0 : i32
    %c0_i32_0 = arith.constant 0 : i32
    %c0_i32_1 = arith.constant 0 : i32
    return %arg0, %c0_i32, %1, %c0_i32_0 : i32, i32, i32, i32
  }
  func.func @transform_3(%arg0: i32, %arg1: i32, %arg2: i32) -> (i32, i32, i32, i32) {
    %c1_i32 = arith.constant 1 : i32
    %0 = arith.muli %arg1, %c1_i32 : i32
    %1 = arith.addi %0, %arg2 : i32
    %c0_i32 = arith.constant 0 : i32
    %c0_i32_0 = arith.constant 0 : i32
    %c0_i32_1 = arith.constant 0 : i32
    return %arg0, %c0_i32, %1, %c0_i32_0 : i32, i32, i32, i32
  }
  func.func @transform_4(%arg0: i32, %arg1: i32, %arg2: i32) -> (i32, i32, i32, i32) {
    %c1_i32 = arith.constant 1 : i32
    %0 = arith.muli %arg1, %c1_i32 : i32
    %1 = arith.addi %0, %arg2 : i32
    %c0_i32 = arith.constant 0 : i32
    %c0_i32_0 = arith.constant 0 : i32
    %c0_i32_1 = arith.constant 0 : i32
    return %arg0, %c0_i32, %1, %c0_i32_0 : i32, i32, i32, i32
  }
  func.func @transform_5(%arg0: i32, %arg1: i32, %arg2: i32) -> (i32, i32, i32, i32) {
    %c0_i32 = arith.constant 0 : i32
    %c0_i32_0 = arith.constant 0 : i32
    %c0_i32_1 = arith.constant 0 : i32
    return %arg0, %arg1, %c0_i32, %c0_i32_0 : i32, i32, i32, i32
  }
}

</mosaic_0001>

<llo_original>
// kernel: network_wrapper_forward.1
$region0: #{network_wrapper_forward.1}
  #allocation0 [shape = 'u32[]', space=smem, size = 0x4, offset = 0x4, fixed_abs, tag = 'smem constant byte address 0x4 - core index']
  #allocation1 [shape = 'u32[144,128]{1,0:T(1,128)}', space=vmem, size = 0x12000, scoped, tag = 'internal scratch']
  #allocation2 [shape = 'f32[2,128]{1,0:T(2,128)}', space=vmem, size = 0x400, scoped, tag = 'scratch operand']
  %s0 = inlined_call_operand.vmem [shape: f32[12], index: 0, kind: input, shape index: {}]
  %s1 = inlined_call_operand.vmem [shape: f32[3], index: 1, kind: input, shape index: {}]
  %s2 = inlined_call_operand.vmem [shape: f32[2,4,2,128], index: 2, kind: input, shape index: {}]
  %s3 = inlined_call_operand.vmem [shape: f32[2,3,2,128], index: 3, kind: input, shape index: {}]
  %s4 = inlined_call_operand.vmem [shape: f32[2,3,2,128], index: 4, kind: output, shape index: {0}]
  %s5 = inlined_call_operand.vmem [shape: f32[2,1,1,1], index: 5, kind: output, shape index: {1}]
  %6 = xla_tuple %s4, %s5
  %s7 = sld [smem:[#allocation0]]
  $region73: #{network_wrapper_forward.1} parent=0
    _
  %s9 = ssub.s32 1, %s7
  %s10 = scalar_select 0, %s9, %s7
  $region1: #{network_wrapper_forward.1} parent=0
    #allocation3 [shape = 'u8[512]{0}', space=smem, size = 0x200, scoped, tag = 'input window, operand 0, single buffered']
    #allocation4 [shape = 's32[2]{0}', space=sflag, size = 0x8, scoped, tag = 'scoped memory for network_wrapper_forward.1']
    #allocation5 [shape = 'u8[512]{0}', space=smem, size = 0x200, scoped, tag = 'input window, operand 1, single buffered']
    #allocation6 [shape = 's32[1]{0}', space=sflag, size = 0x4, scoped, tag = 'scoped memory for network_wrapper_forward.1']
    %11 = vsyncpa [#allocation4], 0
    %12 = vsyncpa [#allocation6], 0
    loop: start=0, step=1, limit=4
    $region2: #{network_wrapper_forward.1} parent=1 // loop_pre_header
      _
    $region3: #{network_wrapper_forward.1} parent=1 // loop_header
      %s14 = sphi 0, %s18
      %p15 = scmp.ge.s32.totalorder %s14, 4
      %s21 = sphi 0, %s40
      %s22 = sphi 0, %s36
      %s23 = sphi 0, %s32
      %s24 = sphi 0, %s21
      %s25 = sphi 0, %s22
      %s26 = sphi 0, %s23
      %s27 = sphi 0, %s24
      %s28 = sphi 0, %s25
      %s29 = sphi 0, %s26
      %s41 = sphi 0, %s41
      %s43 = sphi 0, %s41
      %s44 = sphi 0, %s43
      %s58 = sphi 0, %s44
      %s62 = sphi 0, %s62
      %s64 = sphi 0, %s62
      %s65 = sphi 0, %s64
      %s79 = sphi 0, %s65
      %s89 = sphi 0, %s91
      %s92 = sphi 0, %s89
      %s93 = sphi 0, %s92
      %s109 = sphi 0, %s93
      %s119 = sphi 0, %s121
      %s122 = sphi 0, %s119
      %s123 = sphi 0, %s122
      %s139 = sphi 0, %s123
      %s149 = sphi 0, %s151
      %s152 = sphi 0, %s149
      %s153 = sphi 0, %s152
      %s169 = sphi 0, %s153
      %s177 = sphi 0, %s179
      %s180 = sphi 0, %s177
      %s181 = sphi 0, %s180
      %s197 = sphi 0, %s181
    $region4: #{network_wrapper_forward.1} parent=1 // loop_header_branch
      %17 = sbr.rel (%p15) target = $region8
    $region5: #{network_wrapper_forward.1} parent=1 // loop_body
      %s19 = ssub.s32 %s14, 1
      %s20 = ssub.s32 %s14, 2
      %s30 = sadd.s32 1, %s23
      %p31 = scmp.ge.s32.totalorder %s30, 1
      %s32 = scalar_select %p31, 0, %s30
      %s33 = sadd.s32 1, %s22
      %s34 = scalar_select %p31, %s33, %s22
      %p35 = scmp.ge.s32.totalorder %s34, 1
      %s36 = scalar_select %p35, 0, %s34
      %s37 = sadd.s32 1, %s21
      %s38 = scalar_select %p35, %s37, %s21
      %p39 = scmp.ge.s32.totalorder %s38, 2
      %s40 = scalar_select %p39, 0, %s38
      %s42 = sadd.s32 %s41, 1
      %p45 = scmp.eq.s32.totalorder %s14, 1
      %p46 = scmp.ne.s32.totalorder %s41, %s43
      %p47 = scmp.eq.s32.totalorder %s14, 0
      %p48 = por %p46, %p47
      %p49 = scmp.ne.s32.totalorder %s41, %s43
      %p50 = scmp.eq.s32.totalorder %s19, 1
      %p51 = por %p49, %p50
      %p52 = scmp.ne.s32.totalorder %s43, %s44
      %p53 = scmp.eq.s32.totalorder %s19, 0
      %p54 = por %p52, %p53
      %p55 = scmp.ne.s32.totalorder %s43, %s44
      %p56 = scmp.eq.s32.totalorder %s20, 1
      %p57 = por %p55, %p56
      %p59 = scmp.ne.s32.totalorder %s44, %s58
      %p60 = scmp.eq.s32.totalorder %s20, 0
      %p61 = por %p59, %p60
      %s63 = sadd.s32 %s62, 1
      %p66 = scmp.eq.s32.totalorder %s14, 1
      %p67 = scmp.ne.s32.totalorder %s62, %s64
      %p68 = scmp.eq.s32.totalorder %s14, 0
      %p69 = por %p67, %p68
      %p70 = scmp.ne.s32.totalorder %s62, %s64
      %p71 = scmp.eq.s32.totalorder %s19, 1
      %p72 = por %p70, %p71
      %p73 = scmp.ne.s32.totalorder %s64, %s65
      %p74 = scmp.eq.s32.totalorder %s19, 0
      %p75 = por %p73, %p74
      %p76 = scmp.ne.s32.totalorder %s64, %s65
      %p77 = scmp.eq.s32.totalorder %s20, 1
      %p78 = por %p76, %p77
      %p80 = scmp.ne.s32.totalorder %s65, %s79
      %p81 = scmp.eq.s32.totalorder %s20, 0
      %p82 = por %p80, %p81
      %s83 = sadd.s32 %s22, %s23
      %s84 = sadd.s32 %s36, %s32
      %s85 = ssub.s32 %s21, %s40
      %s86 = ssub.s32 %s83, %s84
      %s87 = sor.u32 %s85, %s86
      %p88 = scmp.eq.s32.totalorder %s87, 0
      %s90 = sadd.s32 %s89, 1
      %s91 = scalar_select %p88, %s89, %s90
      %p94 = pneg %p88
      %p95 = scmp.eq.s32.totalorder %s14, 1
      %p96 = por %p94, %p95
      %p97 = scmp.ne.s32.totalorder %s89, %s92
      %p98 = scmp.eq.s32.totalorder %s14, 0
      %p99 = por %p97, %p98
      %p100 = scmp.ne.s32.totalorder %s89, %s92
      %p101 = scmp.eq.s32.totalorder %s19, 1
      %p102 = por %p100, %p101
      %p103 = scmp.ne.s32.totalorder %s92, %s93
      %p104 = scmp.eq.s32.totalorder %s19, 0
      %p105 = por %p103, %p104
      %p106 = scmp.ne.s32.totalorder %s92, %s93
      %p107 = scmp.eq.s32.totalorder %s20, 1
      %p108 = por %p106, %p107
      %p110 = scmp.ne.s32.totalorder %s93, %s109
      %p111 = scmp.eq.s32.totalorder %s20, 0
      %p112 = por %p110, %p111
      %s113 = sadd.s32 %s22, %s23
      %s114 = sadd.s32 %s36, %s32
      %s115 = ssub.s32 %s21, %s40
      %s116 = ssub.s32 %s113, %s114
      %s117 = sor.u32 %s115, %s116
      %p118 = scmp.eq.s32.totalorder %s117, 0
      %s120 = sadd.s32 %s119, 1
      %s121 = scalar_select %p118, %s119, %s120
      %p124 = pneg %p118
      %p125 = scmp.eq.s32.totalorder %s14, 1
      %p126 = por %p124, %p125
      %p127 = scmp.ne.s32.totalorder %s119, %s122
      %p128 = scmp.eq.s32.totalorder %s14, 0
      %p129 = por %p127, %p128
      %p130 = scmp.ne.s32.totalorder %s119, %s122
      %p131 = scmp.eq.s32.totalorder %s19, 1
      %p132 = por %p130, %p131
      %p133 = scmp.ne.s32.totalorder %s122, %s123
      %p134 = scmp.eq.s32.totalorder %s19, 0
      %p135 = por %p133, %p134
      %p136 = scmp.ne.s32.totalorder %s122, %s123
      %p137 = scmp.eq.s32.totalorder %s20, 1
      %p138 = por %p136, %p137
      %p140 = scmp.ne.s32.totalorder %s123, %s139
      %p141 = scmp.eq.s32.totalorder %s20, 0
      %p142 = por %p140, %p141
      %s143 = sadd.s32 %s22, %s23
      %s144 = sadd.s32 %s36, %s32
      %s145 = ssub.s32 %s21, %s40
      %s146 = ssub.s32 %s143, %s144
      %s147 = sor.u32 %s145, %s146
      %p148 = scmp.eq.s32.totalorder %s147, 0
      %s150 = sadd.s32 %s149, 1
      %s151 = scalar_select %p148, %s149, %s150
      %p154 = pneg %p148
      %p155 = scmp.eq.s32.totalorder %s14, 1
      %p156 = por %p154, %p155
      %p157 = scmp.ne.s32.totalorder %s149, %s152
      %p158 = scmp.eq.s32.totalorder %s14, 0
      %p159 = por %p157, %p158
      %p160 = scmp.ne.s32.totalorder %s149, %s152
      %p161 = scmp.eq.s32.totalorder %s19, 1
      %p162 = por %p160, %p161
      %p163 = scmp.ne.s32.totalorder %s152, %s153
      %p164 = scmp.eq.s32.totalorder %s19, 0
      %p165 = por %p163, %p164
      %p166 = scmp.ne.s32.totalorder %s152, %s153
      %p167 = scmp.eq.s32.totalorder %s20, 1
      %p168 = por %p166, %p167
      %p170 = scmp.ne.s32.totalorder %s153, %s169
      %p171 = scmp.eq.s32.totalorder %s20, 0
      %p172 = por %p170, %p171
      %s173 = ssub.s32 %s21, %s40
      %s174 = ssub.s32 %s22, %s36
      %s175 = sor.u32 %s173, %s174
      %p176 = scmp.eq.s32.totalorder %s175, 0
      %s178 = sadd.s32 %s177, 1
      %s179 = scalar_select %p176, %s177, %s178
      %p182 = pneg %p176
      %p183 = scmp.eq.s32.totalorder %s14, 1
      %p184 = por %p182, %p183
      %p185 = scmp.ne.s32.totalorder %s177, %s180
      %p186 = scmp.eq.s32.totalorder %s14, 0
      %p187 = por %p185, %p186
      %p188 = scmp.ne.s32.totalorder %s177, %s180
      %p189 = scmp.eq.s32.totalorder %s19, 1
      %p190 = por %p188, %p189
      %p191 = scmp.ne.s32.totalorder %s180, %s181
      %p192 = scmp.eq.s32.totalorder %s19, 0
      %p193 = por %p191, %p192
      %p194 = scmp.ne.s32.totalorder %s180, %s181
      %p195 = scmp.eq.s32.totalorder %s20, 1
      %p196 = por %p194, %p195
      %p198 = scmp.ne.s32.totalorder %s181, %s197
      %p199 = scmp.eq.s32.totalorder %s20, 0
      %p200 = por %p198, %p199
      %p201 = scmp.le.s32.totalorder 1, %s14
      %p202 = scmp.lt.s32.totalorder %s14, 3
      %p203 = pnand %p201, %p202
      %p204 = pneg %p203
      // Predicated region
      $region9: #{network_wrapper_forward.1} parent=5 // pred_check
        _
      $region10: #{network_wrapper_forward.1} parent=5 // pred_check_branch
        %206 = sbr.rel (%p203) target = $region12
      $region11: #{network_wrapper_forward.1} parent=5 // pred_region
        %s207 = ssub.s32 %s14, 1
        // Predicated region
        $region13: #{network_wrapper_forward.1} parent=11 // pred_check
          %p208 = pneg %p54
        $region14: #{network_wrapper_forward.1} parent=11 // pred_check_branch
          %210 = sbr.rel (%p208) target = $region16
        $region15: #{network_wrapper_forward.1} parent=11 // pred_region
          %s212 = ssub.s32 16, 16
          %213 = vsyncadd [#allocation4], %s212
          %s215 = sshll.u32 %s0, 4
          %s216 = int_to_ptr.vmem [resolvable:$true] %s215
          %218 = dma.vmem_to_smem %s216, 16, [#allocation3], [#allocation4]
        $region16: #{network_wrapper_forward.1} parent=11 // pred_fallthru
          _
        // Predicated region
        $region17: #{network_wrapper_forward.1} parent=11 // pred_check
          %p219 = pneg %p75
        $region18: #{network_wrapper_forward.1} parent=11 // pred_check_branch
          %221 = sbr.rel (%p219) target = $region20
        $region19: #{network_wrapper_forward.1} parent=11 // pred_region
          %s223 = ssub.s32 16, 16
          %224 = vsyncadd [#allocation6], %s223
          %s226 = sshll.u32 %s1, 4
          %s227 = int_to_ptr.vmem [resolvable:$true] %s226
          %229 = dma.vmem_to_smem %s227, 16, [#allocation5], [#allocation6]
        $region20: #{network_wrapper_forward.1} parent=11 // pred_fallthru
          _
      $region12: #{network_wrapper_forward.1} parent=5 // pred_fallthru
        _
      %p230 = scmp.lt.s32.totalorder %s14, 2
      // Predicated region
      $region21: #{network_wrapper_forward.1} parent=5 // pred_check
        %p231 = pneg %p230
      $region22: #{network_wrapper_forward.1} parent=5 // pred_check_branch
        %233 = sbr.rel (%p231) target = $region24
      $region23: #{network_wrapper_forward.1} parent=5 // pred_region
        // Predicated region
        $region25: #{network_wrapper_forward.1} parent=23 // pred_check
          %p234 = pneg %p99
        $region26: #{network_wrapper_forward.1} parent=23 // pred_check_branch
          %236 = sbr.rel (%p234) target = $region28
        $region27: #{network_wrapper_forward.1} parent=23 // pred_region
          %s237 = sadd.s32 %s22, %s23
          %p238 = scmp.lt.s32.totalorder %s21, 1
          %s239 = scalar_select %p238, %s21, 1
          %p240 = scmp.lt.s32.totalorder %s237, 0
          %s241 = scalar_select %p240, %s237, 0
          %s242 = smul.addr %s239, 4
          %s243 = sadd.s32 %s241, %s242
          %s244 = smul.addr %s243, 2
          %s245 = scalar_lea.vmem %s2, %s244
          %s246 = sadd.s32 %s22, %s23
        $region28: #{network_wrapper_forward.1} parent=23 // pred_fallthru
          _
        // Predicated region
        $region29: #{network_wrapper_forward.1} parent=23 // pred_check
          %p247 = pneg %p129
        $region30: #{network_wrapper_forward.1} parent=23 // pred_check_branch
          %249 = sbr.rel (%p247) target = $region32
        $region31: #{network_wrapper_forward.1} parent=23 // pred_region
          %s250 = sadd.s32 %s22, %s23
          %p251 = scmp.lt.s32.totalorder %s21, 1
          %s252 = scalar_select %p251, %s21, 1
          %p253 = scmp.lt.s32.totalorder %s250, 0
          %s254 = scalar_select %p253, %s250, 0
          %s255 = smul.addr %s252, 3
          %s256 = sadd.s32 %s254, %s255
          %s257 = smul.addr %s256, 2
          %s258 = scalar_lea.vmem %s3, %s257
          %s259 = sadd.s32 %s22, %s23
        $region32: #{network_wrapper_forward.1} parent=23 // pred_fallthru
          _
      $region24: #{network_wrapper_forward.1} parent=5 // pred_fallthru
        _
      %p260 = scmp.le.s32.totalorder 1, %s14
      %p261 = scmp.lt.s32.totalorder %s14, 3
      %p262 = pnand %p260, %p261
      %p263 = pneg %p262
      // Predicated region
      $region33: #{network_wrapper_forward.1} parent=5 // pred_check
        _
      $region34: #{network_wrapper_forward.1} parent=5 // pred_check_branch
        %265 = sbr.rel (%p262) target = $region36
      $region35: #{network_wrapper_forward.1} parent=5 // pred_region
        %s266 = ssub.s32 %s14, 1
        // Predicated region
        $region37: #{network_wrapper_forward.1} parent=35 // pred_check
          %p267 = pneg %p54
        $region38: #{network_wrapper_forward.1} parent=35 // pred_check_branch
          %269 = sbr.rel (%p267) target = $region40
        $region39: #{network_wrapper_forward.1} parent=35 // pred_region
          %270 = dma.done [#allocation4], 16
        $region40: #{network_wrapper_forward.1} parent=35 // pred_fallthru
          _
        // Predicated region
        $region41: #{network_wrapper_forward.1} parent=35 // pred_check
          %p271 = pneg %p75
        $region42: #{network_wrapper_forward.1} parent=35 // pred_check_branch
          %273 = sbr.rel (%p271) target = $region44
        $region43: #{network_wrapper_forward.1} parent=35 // pred_region
          %274 = dma.done [#allocation6], 16
        $region44: #{network_wrapper_forward.1} parent=35 // pred_fallthru
          _
        %275 = sfence
        %p276 = pneg %p54
        %p277 = pneg %p51
        %p278 = pneg %p75
        %p279 = pneg %p72
        %s280 = sadd.s32 %s25, %s26
        %p281 = scmp.lt.s32.totalorder %s24, 1
        %s282 = scalar_select %p281, %s24, 1
        %p283 = scmp.lt.s32.totalorder %s280, 0
        %s284 = scalar_select %p283, %s280, 0
        %s285 = smul.addr %s282, 4
        %s286 = sadd.s32 %s284, %s285
        %s287 = smul.addr %s286, 2
        %s288 = scalar_lea.vmem %s2, %s287
        %p289 = pneg %p105
        %p290 = pneg %p102
        %s291 = sadd.s32 %s25, %s26
        %p292 = scmp.lt.s32.totalorder %s24, 1
        %s293 = scalar_select %p292, %s24, 1
        %p294 = scmp.lt.s32.totalorder %s291, 0
        %s295 = scalar_select %p294, %s291, 0
        %s296 = smul.addr %s293, 3
        %s297 = sadd.s32 %s295, %s296
        %s298 = smul.addr %s297, 2
        %s299 = scalar_lea.vmem %s3, %s298
        %p300 = pneg %p135
        %p301 = pneg %p132
        %p302 = pneg %p165
        %p303 = pneg %p162
        %s304 = sadd.s32 %s25, %s26
        %p305 = scmp.lt.s32.totalorder %s24, 1
        %s306 = scalar_select %p305, %s24, 1
        %p307 = scmp.lt.s32.totalorder %s304, 0
        %s308 = scalar_select %p307, %s304, 0
        %s309 = smul.addr %s306, 3
        %s310 = sadd.s32 %s308, %s309
        %s311 = smul.addr %s310, 2
        %s312 = scalar_lea.vmem %s4, %s311
        %p313 = pneg %p193
        %p314 = pneg %p190
        %p315 = scmp.lt.s32.totalorder %s24, 1
        %s316 = scalar_select %p315, %s24, 1
        %p317 = scmp.lt.s32.totalorder %s25, 0
        %s318 = scalar_select %p317, %s25, 0
        %s319 = sadd.s32 %s318, %s316
        %s320 = scalar_lea.vmem %s5, %s319
        %s321 = sadd.s32 %s25, %s26
        %p322 = scmp.lt.s32.totalorder %s24, 1
        %s323 = scalar_select %p322, %s24, 1
        %p324 = scmp.lt.s32.totalorder %s321, 0
        %s325 = scalar_select %p324, %s321, 0
        %s326 = smul.addr %s323, 4
        %s327 = sadd.s32 %s325, %s326
        %s328 = smul.addr %s327, 2
        %s329 = scalar_lea.vmem %s2, %s328
        %s330 = sadd.s32 %s25, %s26
        %s331 = sadd.s32 %s25, %s26
        %p332 = scmp.lt.s32.totalorder %s24, 1
        %s333 = scalar_select %p332, %s24, 1
        %p334 = scmp.lt.s32.totalorder %s331, 0
        %s335 = scalar_select %p334, %s331, 0
        %s336 = smul.addr %s333, 3
        %s337 = sadd.s32 %s335, %s336
        %s338 = smul.addr %s337, 2
        %s339 = scalar_lea.vmem %s3, %s338
        %s340 = sadd.s32 %s25, %s26
        %s341 = sadd.s32 %s25, %s26
        %p342 = scmp.lt.s32.totalorder %s24, 1
        %s343 = scalar_select %p342, %s24, 1
        %p344 = scmp.lt.s32.totalorder %s341, 0
        %s345 = scalar_select %p344, %s341, 0
        %s346 = smul.addr %s343, 3
        %s347 = sadd.s32 %s345, %s346
        %s348 = smul.addr %s347, 2
        %s349 = scalar_lea.vmem %s4, %s348
        %s350 = sadd.s32 %s25, %s26
        %p351 = scmp.lt.s32.totalorder %s24, 1
        %s352 = scalar_select %p351, %s24, 1
        %p353 = scmp.lt.s32.totalorder %s25, 0
        %s354 = scalar_select %p353, %s25, 0
        %s355 = sadd.s32 %s354, %s352
        %s356 = scalar_lea.vmem %s5, %s355
        %p357 = scmp.eq.s32.totalorder %s26, 0
        // Predicated region
        $region45: #{network_wrapper_forward.1} parent=35 // pred_check
          %p358 = pneg %p357
        $region46: #{network_wrapper_forward.1} parent=35 // pred_check_branch
          %360 = sbr.rel (%p358) target = $region48
        $region47: #{network_wrapper_forward.1} parent=35 // pred_region
          %361 = vst [vmem:[#allocation2] sm:$0x3] 0.0
        $region48: #{network_wrapper_forward.1} parent=35 // pred_fallthru
          _
        %v362 = vld [vmem:[%s329] sm:$0x3]
        %v363 = vld [vmem:[%s329 + $0x2] sm:$0x3]
        %v364 = vld [vmem:[%s329 + $0x4] sm:$0x3]
        %v365 = vld [vmem:[%s329 + $0x6] sm:$0x3]
        %v366 = vld [vmem:[%s339] sm:$0x3]
        %v367 = vld [vmem:[%s339 + $0x2] sm:$0x3]
        %v368 = vld [vmem:[%s339 + $0x4] sm:$0x3]
        %s369 = sld [smem:[#allocation3]]
        %v370 = vstv %s369
        %v371 = vmul.f32 %v362, %v370
        %s372 = sld [smem:[#allocation3 + $0x3]]
        %v373 = vstv %s372
        %v374 = vmul.f32 %v363, %v373
        %v375 = vadd.f32 %v371, %v374
        %s376 = sld [smem:[#allocation3 + $0x6]]
        %v377 = vstv %s376
        %v378 = vmul.f32 %v364, %v377
        %v379 = vadd.f32 %v375, %v378
        %s380 = sld [smem:[#allocation3 + $0x9]]
        %v381 = vstv %s380
        %v382 = vmul.f32 %v365, %v381
        %v383 = vadd.f32 %v379, %v382
        %s384 = sld [smem:[#allocation5]]
        %v385 = vstv %s384
        %v386 = vadd.f32 %v383, %v385
        %387 = vst [vmem:[%s349] sm:$0x3] %v386
        %v388 = vsub.f32 %v386, %v366
        %v389 = vmul.f32 %v388, %v388
        %s390 = sld [smem:[#allocation3 + $0x1]]
        %v391 = vstv %s390
        %v392 = vmul.f32 %v362, %v391
        %s393 = sld [smem:[#allocation3 + $0x4]]
        %v394 = vstv %s393
        %v395 = vmul.f32 %v363, %v394
        %v396 = vadd.f32 %v392, %v395
        %s397 = sld [smem:[#allocation3 + $0x7]]
        %v398 = vstv %s397
        %v399 = vmul.f32 %v364, %v398
        %v400 = vadd.f32 %v396, %v399
        %s401 = sld [smem:[#allocation3 + $0xa]]
        %v402 = vstv %s401
        %v403 = vmul.f32 %v365, %v402
        %v404 = vadd.f32 %v400, %v403
        %s405 = sld [smem:[#allocation5 + $0x1]]
        %v406 = vstv %s405
        %v407 = vadd.f32 %v404, %v406
        %s408 = scalar_lea.vmem %s349, 2
        %409 = vst [vmem:[%s408] sm:$0x3] %v407
        %v410 = vsub.f32 %v407, %v367
        %v411 = vmul.f32 %v410, %v410
        %v412 = vadd.f32 %v389, %v411
        %s413 = sld [smem:[#allocation3 + $0x2]]
        %v414 = vstv %s413
        %v415 = vmul.f32 %v362, %v414
        %s416 = sld [smem:[#allocation3 + $0x5]]
        %v417 = vstv %s416
        %v418 = vmul.f32 %v363, %v417
        %v419 = vadd.f32 %v415, %v418
        %s420 = sld [smem:[#allocation3 + $0x8]]
        %v421 = vstv %s420
        %v422 = vmul.f32 %v364, %v421
        %v423 = vadd.f32 %v419, %v422
        %s424 = sld [smem:[#allocation3 + $0xb]]
        %v425 = vstv %s424
        %v426 = vmul.f32 %v365, %v425
        %v427 = vadd.f32 %v423, %v426
        %s428 = sld [smem:[#allocation5 + $0x2]]
        %v429 = vstv %s428
        %v430 = vadd.f32 %v427, %v429
        %s431 = scalar_lea.vmem %s349, 4
        %432 = vst [vmem:[%s431] sm:$0x3] %v430
        %v433 = vsub.f32 %v430, %v368
        %v434 = vmul.f32 %v433, %v433
        %v435 = vadd.f32 %v412, %v434
        %v436 = vld [vmem:[#allocation2] sm:$0x3]
        %v437 = vadd.f32 %v436, %v435
        %438 = vst [vmem:[#allocation2] sm:$0x3] %v437
        // Predicated region
        $region49: #{network_wrapper_forward.1} parent=35 // pred_check
          %p439 = pneg %p357
        $region50: #{network_wrapper_forward.1} parent=35 // pred_check_branch
          %441 = sbr.rel (%p439) target = $region52
        $region51: #{network_wrapper_forward.1} parent=35 // pred_region
          %v442 = vld [vmem:[#allocation2] sm:$0x3]
          %vm443 = vcmask 1041408
          %v444 = vsel %vm443, %v442, 0.0
          %445 = vadd.xlane.f32.xlu0 %v444
          %v446 = vpop.xlane.xlu0 %445
          %v447 = vrot.slane %v446, 4
          %v448 = vadd.f32 %v446, %v447
          %v449 = vrot.slane %v448, 2
          %v450 = vadd.f32 %v448, %v449
          %v451 = vrot.slane %v450, 1
          %v452 = vadd.f32 %v450, %v451
          %s453 = vtos %v452
          %v454 = vstv %s453
          %vm455 = vcmask 0
          %456 = vst.msk [vmem:[%s356] sm:$0x1] %vm455, %v454
        $region52: #{network_wrapper_forward.1} parent=35 // pred_fallthru
          _
        %s457 = sadd.s32 %s25, %s26
        %p458 = scmp.lt.s32.totalorder %s24, 1
        %s459 = scalar_select %p458, %s24, 1
        %p460 = scmp.lt.s32.totalorder %s457, 0
        %s461 = scalar_select %p460, %s457, 0
        %s462 = smul.addr %s459, 3
        %s463 = sadd.s32 %s461, %s462
        %s464 = smul.addr %s463, 2
        %s465 = scalar_lea.vmem %s4, %s464
        %p466 = scmp.lt.s32.totalorder %s24, 1
        %s467 = scalar_select %p466, %s24, 1
        %p468 = scmp.lt.s32.totalorder %s25, 0
        %s469 = scalar_select %p468, %s25, 0
        %s470 = sadd.s32 %s469, %s467
        %s471 = scalar_lea.vmem %s5, %s470
        // Predicated region
        $region53: #{network_wrapper_forward.1} parent=35 // pred_check
          %p472 = pneg %p162
        $region54: #{network_wrapper_forward.1} parent=35 // pred_check_branch
          %474 = sbr.rel (%p472) target = $region56
        $region55: #{network_wrapper_forward.1} parent=35 // pred_region
          %s475 = sadd.s32 %s25, %s26
        $region56: #{network_wrapper_forward.1} parent=35 // pred_fallthru
          _
        // Predicated region
        $region57: #{network_wrapper_forward.1} parent=35 // pred_check
          %p476 = pneg %p190
        $region58: #{network_wrapper_forward.1} parent=35 // pred_check_branch
          %478 = sbr.rel (%p476) target = $region60
        $region59: #{network_wrapper_forward.1} parent=35 // pred_region
          _
        $region60: #{network_wrapper_forward.1} parent=35 // pred_fallthru
          _
      $region36: #{network_wrapper_forward.1} parent=5 // pred_fallthru
        _
      %p479 = scmp.le.s32.totalorder 2, %s14
      // Predicated region
      $region61: #{network_wrapper_forward.1} parent=5 // pred_check
        %p480 = pneg %p479
      $region62: #{network_wrapper_forward.1} parent=5 // pred_check_branch
        %482 = sbr.rel (%p480) target = $region64
      $region63: #{network_wrapper_forward.1} parent=5 // pred_region
        %s483 = ssub.s32 %s14, 2
        // Predicated region
        $region65: #{network_wrapper_forward.1} parent=63 // pred_check
          %p484 = pneg %p168
        $region66: #{network_wrapper_forward.1} parent=63 // pred_check_branch
          %486 = sbr.rel (%p484) target = $region68
        $region67: #{network_wrapper_forward.1} parent=63 // pred_region
          %s487 = sadd.s32 %s28, %s29
          %p488 = scmp.lt.s32.totalorder %s27, 1
          %s489 = scalar_select %p488, %s27, 1
          %p490 = scmp.lt.s32.totalorder %s487, 0
          %s491 = scalar_select %p490, %s487, 0
          %s492 = smul.addr %s489, 3
          %s493 = sadd.s32 %s491, %s492
          %s494 = smul.addr %s493, 2
          %s495 = scalar_lea.vmem %s4, %s494
        $region68: #{network_wrapper_forward.1} parent=63 // pred_fallthru
          _
        // Predicated region
        $region69: #{network_wrapper_forward.1} parent=63 // pred_check
          %p496 = pneg %p196
        $region70: #{network_wrapper_forward.1} parent=63 // pred_check_branch
          %498 = sbr.rel (%p496) target = $region72
        $region71: #{network_wrapper_forward.1} parent=63 // pred_region
          %p499 = scmp.lt.s32.totalorder %s27, 1
          %s500 = scalar_select %p499, %s27, 1
          %p501 = scmp.lt.s32.totalorder %s28, 0
          %s502 = scalar_select %p501, %s28, 0
          %s503 = sadd.s32 %s502, %s500
          %s504 = scalar_lea.vmem %s5, %s503
        $region72: #{network_wrapper_forward.1} parent=63 // pred_fallthru
          _
      $region64: #{network_wrapper_forward.1} parent=5 // pred_fallthru
        _
    $region6: #{network_wrapper_forward.1} parent=1 // loop_footer
      %s18 = sadd.s32 1, %s14
    $region7: #{network_wrapper_forward.1} parent=1 // loop_footer_branch
      %13 = sbr.rel target = $region3
    $region8: #{network_wrapper_forward.1} parent=1 // loop_exit
      _
    %505 = vsyncpa [#allocation4], 1
    %s506 = scalar_lea.sflag [#allocation4], 1
    %507 = vsyncpa %s506, 1
    %508 = vsyncpa [#allocation6], 1

</llo_original>
